<compile_context>
chip_gen: v7x
topology: tpu7x:2x2x1
jax: 0.10.0
libtpu: 0.0.40
codegen_flags: <defaults>
</compile_context>

<pallas_src>
import functools

import jax
import jax.numpy as jnp
from jax.experimental import pallas as pl
from jax.experimental.pallas import tpu as pltpu


def _gated_attn_kernel(x_ref, wab_ref, bab_ref, wc_ref, bc_ref, a_out_ref, *, D):
    # One fused matmul for both branches: h = x @ [Wa^T | Wb^T] + [ba | bb]
    # (native-dtype inputs into the MXU, f32 accumulation).
    h = (
        jnp.dot(x_ref[...], wab_ref[...], preferred_element_type=jnp.float32)
        + bab_ref[...]
    )
    a = jnp.tanh(h[:, :D])            # attention_a: Linear + Tanh   (f32 math)
    b = jax.nn.sigmoid(h[:, D:])      # attention_b: Linear + Sigmoid (f32 math)
    gated = (a * b).astype(wc_ref.dtype)
    A = (
        jnp.dot(gated, wc_ref[...], preferred_element_type=jnp.float32)
        + bc_ref[...]
    )
    a_out_ref[...] = A.astype(a_out_ref.dtype)


def attn_net_gated(x, wa_t, ba, wb_t, bb, wc_t, bc, *, n_tile=1024):
    """x: (N, L); wa_t/wb_t: (L, D); ba/bb: (D,); wc_t: (D, C); bc: (C,).

    Returns (A, x) exactly like the PyTorch module's forward.
    If x is bf16, the weights are cast to bf16 so the matmuls run at native
    MXU rate; all elementwise/transcendental math stays f32.
    """
    N, L = x.shape
    D = wa_t.shape[1]
    C = wc_t.shape[1]

    # ---- Fuse the two branch weights into one (L, 2D) matmul operand. ------
    wab = jnp.concatenate([wa_t, wb_t], axis=1).astype(x.dtype)
    bab = jnp.concatenate([ba, bb]).reshape(1, 2 * D).astype(jnp.float32)

    # ---- Pad n_classes up to a lane-dense multiple of 128 (zero columns). --
    C_pad = max(128, pl.cdiv(C, 128) * 128)
    wc_p = jnp.zeros((D, C_pad), x.dtype).at[:, :C].set(wc_t.astype(x.dtype))
    bc_p = jnp.zeros((1, C_pad), jnp.float32).at[:, :C].set(
        bc.astype(jnp.float32).reshape(1, C)
    )

    # ---- Tile over N (weights stay resident via constant index maps). ------
    if n_tile >= N:
        nt = N                                   # single full block is allowed
    else:
        nt = max(8, (min(n_tile, N) // 8) * 8)   # sublane-aligned tile
    grid = (pl.cdiv(N, nt),)

    itemsize = jnp.dtype(x.dtype).itemsize
    vmem_est = int(
        2 * nt * L * itemsize            # double-buffered x tiles
        + 2 * nt * C_pad * itemsize      # double-buffered output tiles
        + wab.size * itemsize + bab.size * 4
        + wc_p.size * itemsize + bc_p.size * 4
        + 4 * nt * 2 * D * 4             # f32 intermediates headroom
    )
    # Cap at 64 MiB so the same budget is valid on v7x (64 MiB VMEM per TC).
    vmem_limit = min(64 * 1024 * 1024, max(16 * 1024 * 1024, 2 * vmem_est))

    kernel = functools.partial(_gated_attn_kernel, D=D)

    A_full = pl.pallas_call(
        kernel,
        out_shape=jax.ShapeDtypeStruct((N, C_pad), x.dtype),
        grid=grid,
        in_specs=[
            pl.BlockSpec((nt, L), lambda i: (i, 0)),      # x (streamed)
            pl.BlockSpec((L, 2 * D), lambda i: (0, 0)),   # [Wa^T | Wb^T] resident
            pl.BlockSpec((1, 2 * D), lambda i: (0, 0)),   # [ba | bb]     resident
            pl.BlockSpec((D, C_pad), lambda i: (0, 0)),   # Wc^T (padded) resident
            pl.BlockSpec((1, C_pad), lambda i: (0, 0)),   # bc   (padded) resident
        ],
        out_specs=pl.BlockSpec((nt, C_pad), lambda i: (i, 0)),
        compiler_params=pltpu.CompilerParams(
            dimension_semantics=("parallel",),
            vmem_limit_bytes=vmem_limit,
        ),
    )(x, wab, bab, wc_p, bc_p)

    A = A_full[:, :C]
    return A, x


def init_params(key, L, D, n_classes, dtype=jnp.float32):
    """Deterministic synthetic init (PyTorch-Linear-style uniform ranges)."""
    ks = jax.random.split(key, 6)
    lim_a = 1.0 / jnp.sqrt(L)
    lim_c = 1.0 / jnp.sqrt(D)
    wa_t = jax.random.uniform(ks[0], (L, D), dtype, -lim_a, lim_a)
    ba = jax.random.uniform(ks[1], (D,), dtype, -lim_a, lim_a)
    wb_t = jax.random.uniform(ks[2], (L, D), dtype, -lim_a, lim_a)
    bb = jax.random.uniform(ks[3], (D,), dtype, -lim_a, lim_a)
    wc_t = jax.random.uniform(ks[4], (D, n_classes), dtype, -lim_c, lim_c)
    bc = jax.random.uniform(ks[5], (n_classes,), dtype, -lim_c, lim_c)
    return wa_t, ba, wb_t, bb, wc_t, bc


if __name__ == "__main__":
    # Small shapes consistent with the module (L -> D -> n_classes), with a
    # tile smaller than N so the 1-D grid / resident-weight path is exercised.
    N, L, D, n_classes = 64, 256, 128, 1

    key = jax.random.PRNGKey(0)
    kx, kp = jax.random.split(key)
    x = jax.random.normal(kx, (N, L), jnp.float32)
    wa_t, ba, wb_t, bb, wc_t, bc = init_params(kp, L, D, n_classes)

    A, x_out = attn_net_gated(x, wa_t, ba, wb_t, bb, wc_t, bc, n_tile=16)
    jax.block_until_ready((A, x_out))

    # Reference check in plain JAX (same math as the PyTorch forward).
    a_ref = jnp.tanh(x @ wa_t + ba)
    b_ref = jax.nn.sigmoid(x @ wb_t + bb)
    A_ref = (a_ref * b_ref) @ wc_t + bc

    assert A.shape == (N, n_classes)
    assert x_out.shape == (N, L)
    assert jnp.allclose(A, A_ref, atol=1e-5), "mismatch vs reference"
    assert jnp.array_equal(x_out, x), "x must pass through unchanged"

    print("KERNEL_OK")
</pallas_src>

<mosaic_0001>
module attributes {stable_mosaic.version = 11 : i64} {
  func.func @_gated_attn_kernel(%arg0: i32, %arg1: memref<16x256xf32, #tpu.memory_space<vmem>>, %arg2: memref<256x256xf32, #tpu.memory_space<vmem>>, %arg3: memref<1x256xf32, #tpu.memory_space<vmem>>, %arg4: memref<128x128xf32, #tpu.memory_space<vmem>>, %arg5: memref<1x128xf32, #tpu.memory_space<vmem>>, %arg6: memref<16x128xf32, #tpu.memory_space<vmem>>) attributes {dimension_semantics = [#tpu.dimension_semantics<parallel>], iteration_bounds = array<i64: 4>, scalar_prefetch = 0 : i64, scratch_operands = 0 : i64, tpu.core_type = #tpu.core_type<tc>, window_params = [{transform_indices = @transform_0, window_bounds = array<i64: 16, 256>}, {pipeline_mode = #tpu.pipeline_mode<synchronous>, transform_indices = @transform_1, window_bounds = array<i64: 256, 256>}, {pipeline_mode = #tpu.pipeline_mode<synchronous>, transform_indices = @transform_2, window_bounds = array<i64: 1, 256>}, {pipeline_mode = #tpu.pipeline_mode<synchronous>, transform_indices = @transform_3, window_bounds = array<i64: 128, 128>}, {pipeline_mode = #tpu.pipeline_mode<synchronous>, transform_indices = @transform_4, window_bounds = array<i64: 1, 128>}, {transform_indices = @transform_5, window_bounds = array<i64: 16, 128>}]} {
    %c0 = arith.constant 0 : index
    %c0_0 = arith.constant 0 : index
    %0 = vector.load %arg1[%c0, %c0_0] : memref<16x256xf32, #tpu.memory_space<vmem>>, vector<16x256xf32>
    %c0_1 = arith.constant 0 : index
    %c0_2 = arith.constant 0 : index
    %1 = vector.load %arg2[%c0_1, %c0_2] : memref<256x256xf32, #tpu.memory_space<vmem>>, vector<256x256xf32>
    %cst = arith.constant dense<0.000000e+00> : vector<16x256xf32>
    %2 = tpu.matmul %0, %1, %cst {dimension_numbers = #tpu.dot_dimension_numbers<[1], [0], [0], [1], [0, 0, 1, 1], [], []>} : vector<16x256xf32>, vector<256x256xf32>, vector<16x256xf32> -> vector<16x256xf32>
    %c0_3 = arith.constant 0 : index
    %c0_4 = arith.constant 0 : index
    %3 = vector.load %arg3[%c0_3, %c0_4] : memref<1x256xf32, #tpu.memory_space<vmem>>, vector<1x256xf32>
    %4 = vector.broadcast %3 : vector<1x256xf32> to vector<16x256xf32>
    %5 = arith.addf %2, %4 : vector<16x256xf32>
    %6 = vector.extract_strided_slice %5 {offsets = [0, 0], sizes = [16, 128], strides = [1, 1]} : vector<16x256xf32> to vector<16x128xf32>
    %7 = math.tanh %6 : vector<16x128xf32>
    %8 = vector.extract_strided_slice %5 {offsets = [0, 128], sizes = [16, 128], strides = [1, 1]} : vector<16x256xf32> to vector<16x128xf32>
    %9 = arith.negf %8 : vector<16x128xf32>
    %10 = math.exp %9 : vector<16x128xf32>
    %cst_5 = arith.constant 1.000000e+00 : f32
    %11 = vector.broadcast %cst_5 : f32 to vector<16x128xf32>
    %12 = arith.addf %11, %10 : vector<16x128xf32>
    %13 = arith.divf %11, %12 : vector<16x128xf32>
    %14 = arith.mulf %7, %13 : vector<16x128xf32>
    %c0_6 = arith.constant 0 : index
    %c0_7 = arith.constant 0 : index
    %15 = vector.load %arg4[%c0_6, %c0_7] : memref<128x128xf32, #tpu.memory_space<vmem>>, vector<128x128xf32>
    %cst_8 = arith.constant dense<0.000000e+00> : vector<16x128xf32>
    %16 = tpu.matmul %14, %15, %cst_8 {dimension_numbers = #tpu.dot_dimension_numbers<[1], [0], [0], [1], [0, 0, 1, 1], [], []>} : vector<16x128xf32>, vector<128x128xf32>, vector<16x128xf32> -> vector<16x128xf32>
    %c0_9 = arith.constant 0 : index
    %c0_10 = arith.constant 0 : index
    %17 = vector.load %arg5[%c0_9, %c0_10] : memref<1x128xf32, #tpu.memory_space<vmem>>, vector<1x128xf32>
    %18 = vector.broadcast %17 : vector<1x128xf32> to vector<16x128xf32>
    %19 = arith.addf %16, %18 : vector<16x128xf32>
    %c0_11 = arith.constant 0 : index
    %c0_12 = arith.constant 0 : index
    %20 = vector.load %arg6[%c0_11, %c0_12] : memref<16x128xf32, #tpu.memory_space<vmem>>, vector<16x128xf32>
    tpu.vector_store %arg6[%c0_11, %c0_12], %19 {strides = array<i32>} : memref<16x128xf32, #tpu.memory_space<vmem>>, vector<16x128xf32>,
    return
  }
  func.func @transform_0(%arg0: i32) -> (i32, i32) {
    %c0_i32 = arith.constant 0 : i32
    %c0_i32_0 = arith.constant 0 : i32
    return %arg0, %c0_i32 : i32, i32
  }
  func.func @transform_1(%arg0: i32) -> (i32, i32) {
    %c0_i32 = arith.constant 0 : i32
    %c0_i32_0 = arith.constant 0 : i32
    %c0_i32_1 = arith.constant 0 : i32
    return %c0_i32, %c0_i32_0 : i32, i32
  }
  func.func @transform_2(%arg0: i32) -> (i32, i32) {
    %c0_i32 = arith.constant 0 : i32
    %c0_i32_0 = arith.constant 0 : i32
    %c0_i32_1 = arith.constant 0 : i32
    return %c0_i32, %c0_i32_0 : i32, i32
  }
  func.func @transform_3(%arg0: i32) -> (i32, i32) {
    %c0_i32 = arith.constant 0 : i32
    %c0_i32_0 = arith.constant 0 : i32
    %c0_i32_1 = arith.constant 0 : i32
    return %c0_i32, %c0_i32_0 : i32, i32
  }
  func.func @transform_4(%arg0: i32) -> (i32, i32) {
    %c0_i32 = arith.constant 0 : i32
    %c0_i32_0 = arith.constant 0 : i32
    %c0_i32_1 = arith.constant 0 : i32
    return %c0_i32, %c0_i32_0 : i32, i32
  }
  func.func @transform_5(%arg0: i32) -> (i32, i32) {
    %c0_i32 = arith.constant 0 : i32
    %c0_i32_0 = arith.constant 0 : i32
    return %arg0, %c0_i32 : i32, i32
  }
}

</mosaic_0001>

<llo_original>
// kernel: tpu_custom_call.1
$region0: #{tpu_custom_call.1}
  #allocation0 [shape = 'u32[]', space=smem, size = 0x4, offset = 0x4, fixed_abs, tag = 'smem constant byte address 0x4 - core index']
  #allocation1 [shape = 'u32[144,128]{1,0:T(1,128)}', space=vmem, size = 0x12000, scoped, tag = 'internal scratch']
  %s0 = inlined_call_operand.hbm [shape: f32[64,256], index: 0, kind: input, shape index: {}]
  %s1 = inlined_call_operand.hbm [shape: f32[256,256], index: 1, kind: input, shape index: {}]
  %s2 = inlined_call_operand.vmem [shape: f32[1,256], index: 2, kind: input, shape index: {}]
  %s3 = inlined_call_operand.hbm [shape: f32[128,128], index: 3, kind: input, shape index: {}]
  %s4 = inlined_call_operand.vmem [shape: f32[1,128], index: 4, kind: input, shape index: {}]
  %s5 = inlined_call_operand.hbm [shape: f32[64,128], index: 5, kind: output, shape index: {}]
  %s6 = sld [smem:[#allocation0]]
  $region65: #{tpu_custom_call.1} parent=0
    _
  %s8 = ssub.s32 1, %s6
  %s9 = scalar_select 0, %s8, %s6
  $region1: #{tpu_custom_call.1} parent=0
    #allocation2 [shape = 'u8[32768]{0}', space=vmem, size = 0x8000, scoped, tag = 'input window, operand 0']
    #allocation3 [shape = 's32[2]{0}', space=sflag, size = 0x8, scoped, tag = 'scoped memory for tpu_custom_call.1']
    #allocation4 [shape = 's32[2]{0}', space=sflag, size = 0x8, scoped, tag = 'scoped memory for tpu_custom_call.1']
    #allocation5 [shape = 'u8[262144]{0}', space=vmem, size = 0x40000, scoped, tag = 'input window, operand 1, single buffered']
    #allocation6 [shape = 's32[1]{0}', space=sflag, size = 0x4, scoped, tag = 'scoped memory for tpu_custom_call.1']
    #allocation7 [shape = 'u8[65536]{0}', space=vmem, size = 0x10000, scoped, tag = 'input window, operand 3, single buffered']
    #allocation8 [shape = 'u8[16384]{0}', space=vmem, size = 0x4000, scoped, tag = 'output window, operand 0']
    %10 = vsyncpa [#allocation3], 0
    %s11 = scalar_lea.sflag [#allocation3], 1
    %12 = vsyncpa %s11, 0
    %13 = vsyncpa [#allocation6], 0
    %14 = vsyncpa [#allocation4], 0
    %s15 = scalar_lea.sflag [#allocation4], 1
    %16 = vsyncpa %s15, 0
    loop: start=0, step=1, limit=6
    $region2: #{tpu_custom_call.1} parent=1 // loop_pre_header
      _
    $region3: #{tpu_custom_call.1} parent=1 // loop_header
      %s18 = sphi 0, %s22
      %p19 = scmp.ge.s32.totalorder %s18, 6
      %s28 = sphi 0, %s30
      %s31 = sphi 0, %s28
      %s32 = sphi 0, %s31
      %s48 = sphi 0, %s32
      %s52 = sphi 0, %s52
      %s54 = sphi 0, %s52
      %s55 = sphi 0, %s54
      %s69 = sphi 0, %s55
      %s73 = sphi 0, %s73
      %s75 = sphi 0, %s73
      %s76 = sphi 0, %s75
      %s90 = sphi 0, %s76
      %s94 = sphi 0, %s94
      %s96 = sphi 0, %s94
      %s97 = sphi 0, %s96
      %s111 = sphi 0, %s97
      %s115 = sphi 0, %s115
      %s117 = sphi 0, %s115
      %s118 = sphi 0, %s117
      %s132 = sphi 0, %s118
      %s138 = sphi 0, %s140
      %s141 = sphi 0, %s138
      %s142 = sphi 0, %s141
      %s158 = sphi 0, %s142
    $region4: #{tpu_custom_call.1} parent=1 // loop_header_branch
      %21 = sbr.rel (%p19) target = $region8
    $region5: #{tpu_custom_call.1} parent=1 // loop_body
      %s23 = ssub.s32 %s18, 1
      %s24 = ssub.s32 %s18, 2
      %s25 = sadd.s32 %s18, 1
      %s26 = ssub.s32 %s18, %s25
      %p27 = scmp.eq.s32.totalorder %s26, 0
      %s29 = sadd.s32 %s28, 1
      %s30 = scalar_select %p27, %s28, %s29
      %p33 = pneg %p27
      %p34 = scmp.eq.s32.totalorder %s18, 3
      %p35 = por %p33, %p34
      %p36 = scmp.ne.s32.totalorder %s28, %s31
      %p37 = scmp.eq.s32.totalorder %s18, 0
      %p38 = por %p36, %p37
      %p39 = scmp.ne.s32.totalorder %s28, %s31
      %p40 = scmp.eq.s32.totalorder %s23, 3
      %p41 = por %p39, %p40
      %p42 = scmp.ne.s32.totalorder %s31, %s32
      %p43 = scmp.eq.s32.totalorder %s23, 0
      %p44 = por %p42, %p43
      %p45 = scmp.ne.s32.totalorder %s31, %s32
      %p46 = scmp.eq.s32.totalorder %s24, 3
      %p47 = por %p45, %p46
      %p49 = scmp.ne.s32.totalorder %s32, %s48
      %p50 = scmp.eq.s32.totalorder %s24, 0
      %p51 = por %p49, %p50
      %s53 = sadd.s32 %s52, 1
      %p56 = scmp.eq.s32.totalorder %s18, 3
      %p57 = scmp.ne.s32.totalorder %s52, %s54
      %p58 = scmp.eq.s32.totalorder %s18, 0
      %p59 = por %p57, %p58
      %p60 = scmp.ne.s32.totalorder %s52, %s54
      %p61 = scmp.eq.s32.totalorder %s23, 3
      %p62 = por %p60, %p61
      %p63 = scmp.ne.s32.totalorder %s54, %s55
      %p64 = scmp.eq.s32.totalorder %s23, 0
      %p65 = por %p63, %p64
      %p66 = scmp.ne.s32.totalorder %s54, %s55
      %p67 = scmp.eq.s32.totalorder %s24, 3
      %p68 = por %p66, %p67
      %p70 = scmp.ne.s32.totalorder %s55, %s69
      %p71 = scmp.eq.s32.totalorder %s24, 0
      %p72 = por %p70, %p71
      %s74 = sadd.s32 %s73, 1
      %p77 = scmp.eq.s32.totalorder %s18, 3
      %p78 = scmp.ne.s32.totalorder %s73, %s75
      %p79 = scmp.eq.s32.totalorder %s18, 0
      %p80 = por %p78, %p79
      %p81 = scmp.ne.s32.totalorder %s73, %s75
      %p82 = scmp.eq.s32.totalorder %s23, 3
      %p83 = por %p81, %p82
      %p84 = scmp.ne.s32.totalorder %s75, %s76
      %p85 = scmp.eq.s32.totalorder %s23, 0
      %p86 = por %p84, %p85
      %p87 = scmp.ne.s32.totalorder %s75, %s76
      %p88 = scmp.eq.s32.totalorder %s24, 3
      %p89 = por %p87, %p88
      %p91 = scmp.ne.s32.totalorder %s76, %s90
      %p92 = scmp.eq.s32.totalorder %s24, 0
      %p93 = por %p91, %p92
      %s95 = sadd.s32 %s94, 1
      %p98 = scmp.eq.s32.totalorder %s18, 3
      %p99 = scmp.ne.s32.totalorder %s94, %s96
      %p100 = scmp.eq.s32.totalorder %s18, 0
      %p101 = por %p99, %p100
      %p102 = scmp.ne.s32.totalorder %s94, %s96
      %p103 = scmp.eq.s32.totalorder %s23, 3
      %p104 = por %p102, %p103
      %p105 = scmp.ne.s32.totalorder %s96, %s97
      %p106 = scmp.eq.s32.totalorder %s23, 0
      %p107 = por %p105, %p106
      %p108 = scmp.ne.s32.totalorder %s96, %s97
      %p109 = scmp.eq.s32.totalorder %s24, 3
      %p110 = por %p108, %p109
      %p112 = scmp.ne.s32.totalorder %s97, %s111
      %p113 = scmp.eq.s32.totalorder %s24, 0
      %p114 = por %p112, %p113
      %s116 = sadd.s32 %s115, 1
      %p119 = scmp.eq.s32.totalorder %s18, 3
      %p120 = scmp.ne.s32.totalorder %s115, %s117
      %p121 = scmp.eq.s32.totalorder %s18, 0
      %p122 = por %p120, %p121
      %p123 = scmp.ne.s32.totalorder %s115, %s117
      %p124 = scmp.eq.s32.totalorder %s23, 3
      %p125 = por %p123, %p124
      %p126 = scmp.ne.s32.totalorder %s117, %s118
      %p127 = scmp.eq.s32.totalorder %s23, 0
      %p128 = por %p126, %p127
      %p129 = scmp.ne.s32.totalorder %s117, %s118
      %p130 = scmp.eq.s32.totalorder %s24, 3
      %p131 = por %p129, %p130
      %p133 = scmp.ne.s32.totalorder %s118, %s132
      %p134 = scmp.eq.s32.totalorder %s24, 0
      %p135 = por %p133, %p134
      %s136 = ssub.s32 %s18, %s25
      %p137 = scmp.eq.s32.totalorder %s136, 0
      %s139 = sadd.s32 %s138, 1
      %s140 = scalar_select %p137, %s138, %s139
      %p143 = pneg %p137
      %p144 = scmp.eq.s32.totalorder %s18, 3
      %p145 = por %p143, %p144
      %p146 = scmp.ne.s32.totalorder %s138, %s141
      %p147 = scmp.eq.s32.totalorder %s18, 0
      %p148 = por %p146, %p147
      %p149 = scmp.ne.s32.totalorder %s138, %s141
      %p150 = scmp.eq.s32.totalorder %s23, 3
      %p151 = por %p149, %p150
      %p152 = scmp.ne.s32.totalorder %s141, %s142
      %p153 = scmp.eq.s32.totalorder %s23, 0
      %p154 = por %p152, %p153
      %p155 = scmp.ne.s32.totalorder %s141, %s142
      %p156 = scmp.eq.s32.totalorder %s24, 3
      %p157 = por %p155, %p156
      %p159 = scmp.ne.s32.totalorder %s142, %s158
      %p160 = scmp.eq.s32.totalorder %s24, 0
      %p161 = por %p159, %p160
      %p162 = scmp.le.s32.totalorder 1, %s18
      %p163 = scmp.lt.s32.totalorder %s18, 5
      %p164 = pnand %p162, %p163
      %p165 = pneg %p164
      // Predicated region
      $region9: #{tpu_custom_call.1} parent=5 // pred_check
        _
      $region10: #{tpu_custom_call.1} parent=5 // pred_check_branch
        %167 = sbr.rel (%p164) target = $region12
      $region11: #{tpu_custom_call.1} parent=5 // pred_region
        %s168 = ssub.s32 %s18, 1
        // Predicated region
        $region13: #{tpu_custom_call.1} parent=11 // pred_check
          %p169 = pneg %p65
        $region14: #{tpu_custom_call.1} parent=11 // pred_check_branch
          %171 = sbr.rel (%p169) target = $region16
        $region15: #{tpu_custom_call.1} parent=11 // pred_region
          %s173 = ssub.s32 8192, 8192
          %174 = vsyncadd [#allocation6], %s173
          %s175 = sshll.u32 [#allocation5], 4
          %s176 = int_to_ptr.vmem [resolvable:$true] %s175
          %181 = dma.hbm_to_vmem [thread:$0]  %s1, 8192, %s176, [#allocation6], 256, 256, 16
        $region16: #{tpu_custom_call.1} parent=11 // pred_fallthru
          _
        // Predicated region
        $region17: #{tpu_custom_call.1} parent=11 // pred_check
          %p182 = pneg %p86
        $region18: #{tpu_custom_call.1} parent=11 // pred_check_branch
          %184 = sbr.rel (%p182) target = $region20
        $region19: #{tpu_custom_call.1} parent=11 // pred_region
          _
        $region20: #{tpu_custom_call.1} parent=11 // pred_fallthru
          _
        // Predicated region
        $region21: #{tpu_custom_call.1} parent=11 // pred_check
          %p185 = pneg %p107
        $region22: #{tpu_custom_call.1} parent=11 // pred_check_branch
          %187 = sbr.rel (%p185) target = $region24
        $region23: #{tpu_custom_call.1} parent=11 // pred_region
          %s189 = ssub.s32 2048, 2048
          %190 = vsyncadd [#allocation6], %s189
          %s191 = sshll.u32 [#allocation7], 4
          %s192 = int_to_ptr.vmem [resolvable:$true] %s191
          %197 = dma.hbm_to_vmem [thread:$0]  %s3, 2048, %s192, [#allocation6], 128, 128, 8
        $region24: #{tpu_custom_call.1} parent=11 // pred_fallthru
          _
        // Predicated region
        $region25: #{tpu_custom_call.1} parent=11 // pred_check
          %p198 = pneg %p128
        $region26: #{tpu_custom_call.1} parent=11 // pred_check_branch
          %200 = sbr.rel (%p198) target = $region28
        $region27: #{tpu_custom_call.1} parent=11 // pred_region
          _
        $region28: #{tpu_custom_call.1} parent=11 // pred_fallthru
          _
      $region12: #{tpu_custom_call.1} parent=5 // pred_fallthru
        _
      %p201 = scmp.lt.s32.totalorder %s18, 4
      // Predicated region
      $region29: #{tpu_custom_call.1} parent=5 // pred_check
        %p202 = pneg %p201
      $region30: #{tpu_custom_call.1} parent=5 // pred_check_branch
        %204 = sbr.rel (%p202) target = $region32
      $region31: #{tpu_custom_call.1} parent=5 // pred_region
        // Predicated region
        $region33: #{tpu_custom_call.1} parent=31 // pred_check
          %p205 = pneg %p38
        $region34: #{tpu_custom_call.1} parent=31 // pred_check_branch
          %207 = sbr.rel (%p205) target = $region36
        $region35: #{tpu_custom_call.1} parent=31 // pred_region
          %s208 = sand.u32 %s28, 1
          %s209 = scalar_lea.sflag [#allocation3], %s208
          %s210 = sand.u32 %s28, 1
          %s211 = smul.addr %s210, 32
          %s212 = scalar_lea.vmem [#allocation2], %s211
          %s213 = smul.u32 2, %s18
          %s215 = ssub.s32 512, 512
          %216 = vsyncadd %s209, %s215
          %s217 = smul.addr %s213, 2
          %s218 = smul.addr %s217, 128
          %s219 = scalar_lea.hbm %s0, %s218
          %s220 = sshll.u32 %s212, 4
          %s221 = int_to_ptr.vmem [resolvable:$true] %s220
          %226 = dma.hbm_to_vmem [thread:$0]  %s219, 512, %s221, %s209, 256, 256, 16
        $region36: #{tpu_custom_call.1} parent=31 // pred_fallthru
          _
      $region32: #{tpu_custom_call.1} parent=5 // pred_fallthru
        _
      %p227 = scmp.le.s32.totalorder 1, %s18
      %p228 = scmp.lt.s32.totalorder %s18, 5
      %p229 = pnand %p227, %p228
      %p230 = pneg %p229
      // Predicated region
      $region37: #{tpu_custom_call.1} parent=5 // pred_check
        _
      $region38: #{tpu_custom_call.1} parent=5 // pred_check_branch
        %232 = sbr.rel (%p229) target = $region40
      $region39: #{tpu_custom_call.1} parent=5 // pred_region
        %s233 = ssub.s32 %s18, 1
        %s234 = sand.u32 %s31, 1
        %s235 = scalar_lea.sflag [#allocation3], %s234
        %s236 = sand.u32 %s31, 1
        %s237 = smul.addr %s236, 32
        %s238 = scalar_lea.vmem [#allocation2], %s237
        // Predicated region
        $region41: #{tpu_custom_call.1} parent=39 // pred_check
          %p239 = pneg %p44
        $region42: #{tpu_custom_call.1} parent=39 // pred_check_branch
          %241 = sbr.rel (%p239) target = $region44
        $region43: #{tpu_custom_call.1} parent=39 // pred_region
          %242 = dma.done %s235, 512
        $region44: #{tpu_custom_call.1} parent=39 // pred_fallthru
          _
        // Predicated region
        $region45: #{tpu_custom_call.1} parent=39 // pred_check
          %p243 = pneg %p65
        $region46: #{tpu_custom_call.1} parent=39 // pred_check_branch
          %245 = sbr.rel (%p243) target = $region48
        $region47: #{tpu_custom_call.1} parent=39 // pred_region
          %246 = dma.done [#allocation6], 8192
        $region48: #{tpu_custom_call.1} parent=39 // pred_fallthru
          _
        // Predicated region
        $region49: #{tpu_custom_call.1} parent=39 // pred_check
          %p247 = pneg %p107
        $region50: #{tpu_custom_call.1} parent=39 // pred_check_branch
          %249 = sbr.rel (%p247) target = $region52
        $region51: #{tpu_custom_call.1} parent=39 // pred_region
          %250 = dma.done [#allocation6], 2048
        $region52: #{tpu_custom_call.1} parent=39 // pred_fallthru
          _
        %s251 = sand.u32 %s31, 1
        %s252 = scalar_lea.sflag [#allocation3], %s251
        %s253 = sand.u32 %s31, 1
        %s254 = smul.addr %s253, 32
        %s255 = scalar_lea.vmem [#allocation2], %s254
        %p256 = pneg %p44
        %p257 = pneg %p41
        %p258 = pneg %p65
        %p259 = pneg %p62
        %p260 = pneg %p86
        %p261 = pneg %p83
        %p262 = pneg %p107
        %p263 = pneg %p104
        %p264 = pneg %p128
        %p265 = pneg %p125
        %p266 = pneg %p154
        %p267 = pneg %p151
        %s268 = sand.u32 %s141, 1
        %s269 = scalar_lea.sflag [#allocation4], %s268
        %s270 = sand.u32 %s141, 1
        %s271 = smul.addr %s270, 16
        %s272 = scalar_lea.vmem [#allocation8], %s271
        %s273 = smul.u32 2, %s23
        %s274 = smul.u32 2, %s23
        %v275 = vld [vmem:[%s238] sm:$0xff]
        %v276 = vld [vmem:[%s238 + $0x8] sm:$0xff]
        %v277 = vld [vmem:[%s238 + $0x10] sm:$0xff]
        %v278 = vld [vmem:[%s238 + $0x18] sm:$0xff]
        %v279 = vld [vmem:[#allocation5] sm:$0xff]
        %v280 = vld [vmem:[#allocation5 + $0x8] sm:$0xff]
        %v281 = vld [vmem:[#allocation5 + $0x10] sm:$0xff]
        %v282 = vld [vmem:[#allocation5 + $0x18] sm:$0xff]
        %v283 = vld [vmem:[#allocation5 + $0x20] sm:$0xff]
        %v284 = vld [vmem:[#allocation5 + $0x28] sm:$0xff]
        %v285 = vld [vmem:[#allocation5 + $0x30] sm:$0xff]
        %v286 = vld [vmem:[#allocation5 + $0x38] sm:$0xff]
        %v287 = vld [vmem:[#allocation5 + $0x40] sm:$0xff]
        %v288 = vld [vmem:[#allocation5 + $0x48] sm:$0xff]
        %v289 = vld [vmem:[#allocation5 + $0x50] sm:$0xff]
        %v290 = vld [vmem:[#allocation5 + $0x58] sm:$0xff]
        %v291 = vld [vmem:[#allocation5 + $0x60] sm:$0xff]
        %v292 = vld [vmem:[#allocation5 + $0x68] sm:$0xff]
        %v293 = vld [vmem:[#allocation5 + $0x70] sm:$0xff]
        %v294 = vld [vmem:[#allocation5 + $0x78] sm:$0xff]
        %v295 = vld [vmem:[#allocation5 + $0x80] sm:$0xff]
        %v296 = vld [vmem:[#allocation5 + $0x88] sm:$0xff]
        %v297 = vld [vmem:[#allocation5 + $0x90] sm:$0xff]
        %v298 = vld [vmem:[#allocation5 + $0x98] sm:$0xff]
        %v299 = vld [vmem:[#allocation5 + $0xa0] sm:$0xff]
        %v300 = vld [vmem:[#allocation5 + $0xa8] sm:$0xff]
        %v301 = vld [vmem:[#allocation5 + $0xb0] sm:$0xff]
        %v302 = vld [vmem:[#allocation5 + $0xb8] sm:$0xff]
        %v303 = vld [vmem:[#allocation5 + $0xc0] sm:$0xff]
        %v304 = vld [vmem:[#allocation5 + $0xc8] sm:$0xff]
        %v305 = vld [vmem:[#allocation5 + $0xd0] sm:$0xff]
        %v306 = vld [vmem:[#allocation5 + $0xd8] sm:$0xff]
        %v307 = vld [vmem:[#allocation5 + $0xe0] sm:$0xff]
        %v308 = vld [vmem:[#allocation5 + $0xe8] sm:$0xff]
        %v309 = vld [vmem:[#allocation5 + $0xf0] sm:$0xff]
        %v310 = vld [vmem:[#allocation5 + $0xf8] sm:$0xff]
        %v311 = vld [vmem:[#allocation5 + $0x100] sm:$0xff]
        %v312 = vld [vmem:[#allocation5 + $0x108] sm:$0xff]
        %v313 = vld [vmem:[#allocation5 + $0x110] sm:$0xff]
        %v314 = vld [vmem:[#allocation5 + $0x118] sm:$0xff]
        %v315 = vld [vmem:[#allocation5 + $0x120] sm:$0xff]
        %v316 = vld [vmem:[#allocation5 + $0x128] sm:$0xff]
        %v317 = vld [vmem:[#allocation5 + $0x130] sm:$0xff]
        %v318 = vld [vmem:[#allocation5 + $0x138] sm:$0xff]
        %v319 = vld [vmem:[#allocation5 + $0x140] sm:$0xff]
        %v320 = vld [vmem:[#allocation5 + $0x148] sm:$0xff]
        %v321 = vld [vmem:[#allocation5 + $0x150] sm:$0xff]
        %v322 = vld [vmem:[#allocation5 + $0x158] sm:$0xff]
        %v323 = vld [vmem:[#allocation5 + $0x160] sm:$0xff]
        %v324 = vld [vmem:[#allocation5 + $0x168] sm:$0xff]
        %v325 = vld [vmem:[#allocation5 + $0x170] sm:$0xff]
        %v326 = vld [vmem:[#allocation5 + $0x178] sm:$0xff]
        %v327 = vld [vmem:[#allocation5 + $0x180] sm:$0xff]
        %v328 = vld [vmem:[#allocation5 + $0x188] sm:$0xff]
        %v329 = vld [vmem:[#allocation5 + $0x190] sm:$0xff]
        %v330 = vld [vmem:[#allocation5 + $0x198] sm:$0xff]
        %v331 = vld [vmem:[#allocation5 + $0x1a0] sm:$0xff]
        %v332 = vld [vmem:[#allocation5 + $0x1a8] sm:$0xff]
        %v333 = vld [vmem:[#allocation5 + $0x1b0] sm:$0xff]
        %v334 = vld [vmem:[#allocation5 + $0x1b8] sm:$0xff]
        %v335 = vld [vmem:[#allocation5 + $0x1c0] sm:$0xff]
        %v336 = vld [vmem:[#allocation5 + $0x1c8] sm:$0xff]
        %v337 = vld [vmem:[#allocation5 + $0x1d0] sm:$0xff]
        %v338 = vld [vmem:[#allocation5 + $0x1d8] sm:$0xff]
        %v339 = vld [vmem:[#allocation5 + $0x1e0] sm:$0xff]
        %v340 = vld [vmem:[#allocation5 + $0x1e8] sm:$0xff]
        %v341 = vld [vmem:[#allocation5 + $0x1f0] sm:$0xff]
        %v342 = vld [vmem:[#allocation5 + $0x1f8] sm:$0xff]
        %v343 = vld [vmem:[%s2] sm:$0x3]
        %v345 = vlaneseq
        %v346 = vshrl.u32 %v345, 7
        %v347 = vsub.s32 0, %v346
        %v348 = vrot.slane %v343, %v347
        %v349 = vlaneseq
        %v350 = vshrl.u32 %v349, 7
        %v351 = vsub.s32 1, %v350
        %v352 = vrot.slane %v343, %v351
        %355 = vmatprep.subr.mxu0 %v280
        %356 = vmatpush1.msra.mxu0 %v279
        %357 = vmatprep.subr.mxu0 %v282
        %358 = vmatpush1.msra.mxu0 %v281
        %359 = vmatprep.subr.mxu0 %v284
        %360 = vmatpush1.msra.mxu0 %v283
        %361 = vmatprep.subr.mxu0 %v286
        %362 = vmatpush1.msra.mxu0 %v285
        %363 = vmatprep.subr.mxu0 %v288
        %364 = vmatpush1.msra.mxu0 %v287
        %365 = vmatprep.subr.mxu0 %v290
        %366 = vmatpush1.msra.mxu0 %v289
        %367 = vmatprep.subr.mxu0 %v292
        %368 = vmatpush1.msra.mxu0 %v291
        %369 = vmatprep.subr.mxu0 %v294
        %370 = vmatpush1.msra.mxu0 %v293
        %371 = vmatprep.subr.mxu0 %v296
        %372 = vmatpush1.msra.mxu0 %v295
        %373 = vmatprep.subr.mxu0 %v298
        %374 = vmatpush1.msra.mxu0 %v297
        %375 = vmatprep.subr.mxu0 %v300
        %376 = vmatpush1.msra.mxu0 %v299
        %377 = vmatprep.subr.mxu0 %v302
        %378 = vmatpush1.msra.mxu0 %v301
        %379 = vmatprep.subr.mxu0 %v304
        %380 = vmatpush1.msra.mxu0 %v303
        %381 = vmatprep.subr.mxu0 %v306
        %382 = vmatpush1.msra.mxu0 %v305
        %383 = vmatprep.subr.mxu0 %v308
        %384 = vmatpush1.msra.mxu0 %v307
        %385 = vmatprep.subr.mxu0 %v310
        %386 = vmatpush1.msra.mxu0 %v309
        %387 = vmatprep.subr.mxu0 %v312
        %388 = vmatpush1.msra.mxu0 %v311
        %389 = vmatprep.subr.mxu0 %v314
        %390 = vmatpush1.msra.mxu0 %v313
        %391 = vmatprep.subr.mxu0 %v316
        %392 = vmatpush1.msra.mxu0 %v315
        %393 = vmatprep.subr.mxu0 %v318
        %394 = vmatpush1.msra.mxu0 %v317
        %395 = vmatprep.subr.mxu0 %v320
        %396 = vmatpush1.msra.mxu0 %v319
        %397 = vmatprep.subr.mxu0 %v322
        %398 = vmatpush1.msra.mxu0 %v321
        %399 = vmatprep.subr.mxu0 %v324
        %400 = vmatpush1.msra.mxu0 %v323
        %401 = vmatprep.subr.mxu0 %v326
        %402 = vmatpush1.msra.mxu0 %v325
        %403 = vmatprep.subr.mxu0 %v328
        %404 = vmatpush1.msra.mxu0 %v327
        %405 = vmatprep.subr.mxu0 %v330
        %406 = vmatpush1.msra.mxu0 %v329
        %407 = vmatprep.subr.mxu0 %v332
        %408 = vmatpush1.msra.mxu0 %v331
        %409 = vmatprep.subr.mxu0 %v334
        %410 = vmatpush1.msra.mxu0 %v333
        %411 = vmatprep.subr.mxu0 %v336
        %412 = vmatpush1.msra.mxu0 %v335
        %413 = vmatprep.subr.mxu0 %v338
        %414 = vmatpush1.msra.mxu0 %v337
        %415 = vmatprep.subr.mxu0 %v340
        %416 = vmatpush1.msra.mxu0 %v339
        %417 = vmatprep.subr.mxu0 %v342
        %418 = vmatpush1.msra.mxu0 %v341
        %419 = vmatprep.mubr.f32.mxu0 %v276
        %420 = vmatmul.mubr.f32.gmra.mrb[0].mxu0 %v275
        %v421 = vpop.f32.mrb[0].mxu0
        %v422 = vadd.f32 %v348, %v421
        %v423 = vpop.f32.mrb[0].mxu0
        %v424 = vadd.f32 %v352, %v423
        %425 = vmatprep.mubr.f32.mxu0 %v278
        %426 = vmatmul.mubr.f32.gmra.mrb[0].mxu0 %v277
        %v427 = vpop.f32.mrb[0].mxu0
        %v428 = vadd.f32 %v348, %v427
        %v429 = vpop.f32.mrb[0].mxu0
        %v430 = vadd.f32 %v352, %v429
        %431 = vdwg.mxu0
        %v432 = vtanh.pop %v422
        %v433 = vtanh.pop %v428
        %v434 = vxor.u32 %v424, 2147483648
        %v435 = vxor.u32 %v430, 2147483648
        %v436 = vmul.f32 %v434, 1.442695
        %v437 = vpow.pop %v436
        %v438 = vmul.f32 %v435, 1.442695
        %v439 = vpow.pop %v438
        %v440 = vadd.f32 %v437, 1.0
        %v441 = vadd.f32 %v439, 1.0
        %v442 = vrcp.pop %v440
        %v443 = vmul.f32 1.0, %v442
        %v444 = vrcp.pop %v441
        %v445 = vmul.f32 1.0, %v444
        %v446 = vmul.f32 %v432, %v443
        %v447 = vmul.f32 %v433, %v445
        %v448 = vld [vmem:[#allocation7] sm:$0xff]
        %v449 = vld [vmem:[#allocation7 + $0x8] sm:$0xff]
        %v450 = vld [vmem:[#allocation7 + $0x10] sm:$0xff]
        %v451 = vld [vmem:[#allocation7 + $0x18] sm:$0xff]
        %v452 = vld [vmem:[#allocation7 + $0x20] sm:$0xff]
        %v453 = vld [vmem:[#allocation7 + $0x28] sm:$0xff]
        %v454 = vld [vmem:[#allocation7 + $0x30] sm:$0xff]
        %v455 = vld [vmem:[#allocation7 + $0x38] sm:$0xff]
        %v456 = vld [vmem:[#allocation7 + $0x40] sm:$0xff]
        %v457 = vld [vmem:[#allocation7 + $0x48] sm:$0xff]
        %v458 = vld [vmem:[#allocation7 + $0x50] sm:$0xff]
        %v459 = vld [vmem:[#allocation7 + $0x58] sm:$0xff]
        %v460 = vld [vmem:[#allocation7 + $0x60] sm:$0xff]
        %v461 = vld [vmem:[#allocation7 + $0x68] sm:$0xff]
        %v462 = vld [vmem:[#allocation7 + $0x70] sm:$0xff]
        %v463 = vld [vmem:[#allocation7 + $0x78] sm:$0xff]
        %v464 = vld [vmem:[%s4] sm:$0x1]
        %v466 = vlaneseq
        %v467 = vshrl.u32 %v466, 7
        %v468 = vsub.s32 0, %v467
        %v469 = vrot.slane %v464, %v468
        %471 = vmatprep.subr.mxu0 0.0
        %472 = vmatpush1.msra.mxu0 %v448
        %473 = vmatprep.subr.mxu0 0.0
        %474 = vmatpush1.msra.mxu0 %v449
        %475 = vmatprep.subr.mxu0 0.0
        %476 = vmatpush1.msra.mxu0 %v450
        %477 = vmatprep.subr.mxu0 0.0
        %478 = vmatpush1.msra.mxu0 %v451
        %479 = vmatprep.subr.mxu0 0.0
        %480 = vmatpush1.msra.mxu0 %v452
        %481 = vmatprep.subr.mxu0 0.0
        %482 = vmatpush1.msra.mxu0 %v453
        %483 = vmatprep.subr.mxu0 0.0
        %484 = vmatpush1.msra.mxu0 %v454
        %485 = vmatprep.subr.mxu0 0.0
        %486 = vmatpush1.msra.mxu0 %v455
        %487 = vmatprep.subr.mxu0 0.0
        %488 = vmatpush1.msra.mxu0 %v456
        %489 = vmatprep.subr.mxu0 0.0
        %490 = vmatpush1.msra.mxu0 %v457
        %491 = vmatprep.subr.mxu0 0.0
        %492 = vmatpush1.msra.mxu0 %v458
        %493 = vmatprep.subr.mxu0 0.0
        %494 = vmatpush1.msra.mxu0 %v459
        %495 = vmatprep.subr.mxu0 0.0
        %496 = vmatpush1.msra.mxu0 %v460
        %497 = vmatprep.subr.mxu0 0.0
        %498 = vmatpush1.msra.mxu0 %v461
        %499 = vmatprep.subr.mxu0 0.0
        %500 = vmatpush1.msra.mxu0 %v462
        %501 = vmatprep.subr.mxu0 0.0
        %502 = vmatpush1.msra.mxu0 %v463
        %503 = vmatprep.subr.mxu0 0.0
        %504 = vmatpush1.msra.mxu0 0.0
        %505 = vmatprep.subr.mxu0 0.0
        %506 = vmatpush1.msra.mxu0 0.0
        %507 = vmatprep.subr.mxu0 0.0
        %508 = vmatpush1.msra.mxu0 0.0
        %509 = vmatprep.subr.mxu0 0.0
        %510 = vmatpush1.msra.mxu0 0.0
        %511 = vmatprep.subr.mxu0 0.0
        %512 = vmatpush1.msra.mxu0 0.0
        %513 = vmatprep.subr.mxu0 0.0
        %514 = vmatpush1.msra.mxu0 0.0
        %515 = vmatprep.subr.mxu0 0.0
        %516 = vmatpush1.msra.mxu0 0.0
        %517 = vmatprep.subr.mxu0 0.0
        %518 = vmatpush1.msra.mxu0 0.0
        %519 = vmatprep.subr.mxu0 0.0
        %520 = vmatpush1.msra.mxu0 0.0
        %521 = vmatprep.subr.mxu0 0.0
        %522 = vmatpush1.msra.mxu0 0.0
        %523 = vmatprep.subr.mxu0 0.0
        %524 = vmatpush1.msra.mxu0 0.0
        %525 = vmatprep.subr.mxu0 0.0
        %526 = vmatpush1.msra.mxu0 0.0
        %527 = vmatprep.subr.mxu0 0.0
        %528 = vmatpush1.msra.mxu0 0.0
        %529 = vmatprep.subr.mxu0 0.0
        %530 = vmatpush1.msra.mxu0 0.0
        %531 = vmatprep.subr.mxu0 0.0
        %532 = vmatpush1.msra.mxu0 0.0
        %533 = vmatprep.subr.mxu0 0.0
        %534 = vmatpush1.msra.mxu0 0.0
        %535 = vmatprep.mubr.f32.mxu0 0.0
        %536 = vmatmul.mubr.f32.gmra.mrb[0].mxu0 %v446
        %v537 = vpop.f32.mrb[0].mxu0
        %v538 = vadd.f32 %v469, %v537
        %v539 = vpop.f32.mrb[0].mxu0
        %540 = vmatprep.mubr.f32.mxu0 0.0
        %541 = vmatmul.mubr.f32.gmra.mrb[0].mxu0 %v447
        %v542 = vpop.f32.mrb[0].mxu0
        %v543 = vadd.f32 %v469, %v542
        %v544 = vpop.f32.mrb[0].mxu0
        %545 = vdwg.mxu0
        %546 = vst [vmem:[%s272] sm:$0xff] %v538
        %547 = vst [vmem:[%s272 + $0x8] sm:$0xff] %v543
        %s548 = sand.u32 %s141, 1
        %s549 = scalar_lea.sflag [#allocation4], %s548
        %s550 = sand.u32 %s141, 1
        %s551 = smul.addr %s550, 16
        %s552 = scalar_lea.vmem [#allocation8], %s551
        // Predicated region
        $region53: #{tpu_custom_call.1} parent=39 // pred_check
          %p553 = pneg %p151
        $region54: #{tpu_custom_call.1} parent=39 // pred_check_branch
          %555 = sbr.rel (%p553) target = $region56
        $region55: #{tpu_custom_call.1} parent=39 // pred_region
          %s556 = smul.u32 2, %s23
          %s558 = ssub.s32 256, 256
          %559 = vsyncadd %s549, %s558
          %s560 = smul.addr %s556, 128
          %s561 = scalar_lea.hbm %s5, %s560
          %s562 = sshll.u32 %s552, 4
          %s563 = int_to_ptr.vmem [resolvable:$true] %s562
          %568 = dma.vmem_to_hbm [thread:$0]  %s563, 256, %s561, %s549, 128, 128, 8
        $region56: #{tpu_custom_call.1} parent=39 // pred_fallthru
          _
      $region40: #{tpu_custom_call.1} parent=5 // pred_fallthru
        _
      %p569 = scmp.le.s32.totalorder 2, %s18
      // Predicated region
      $region57: #{tpu_custom_call.1} parent=5 // pred_check
        %p570 = pneg %p569
      $region58: #{tpu_custom_call.1} parent=5 // pred_check_branch
        %572 = sbr.rel (%p570) target = $region60
      $region59: #{tpu_custom_call.1} parent=5 // pred_region
        %s573 = ssub.s32 %s18, 2
        // Predicated region
        $region61: #{tpu_custom_call.1} parent=59 // pred_check
          %p574 = pneg %p157
        $region62: #{tpu_custom_call.1} parent=59 // pred_check_branch
          %576 = sbr.rel (%p574) target = $region64
        $region63: #{tpu_custom_call.1} parent=59 // pred_region
          %s577 = sand.u32 %s142, 1
          %s578 = scalar_lea.sflag [#allocation4], %s577
          %s579 = sand.u32 %s142, 1
          %s580 = smul.addr %s579, 16
          %s581 = scalar_lea.vmem [#allocation8], %s580
          %582 = dma.done %s578, 256
        $region64: #{tpu_custom_call.1} parent=59 // pred_fallthru
          _
      $region60: #{tpu_custom_call.1} parent=5 // pred_fallthru
        _
    $region6: #{tpu_custom_call.1} parent=1 // loop_footer
      %s22 = sadd.s32 1, %s18
    $region7: #{tpu_custom_call.1} parent=1 // loop_footer_branch
      %17 = sbr.rel target = $region3
    $region8: #{tpu_custom_call.1} parent=1 // loop_exit
      _
    %583 = vsyncpa [#allocation3], 1
    %s584 = scalar_lea.sflag [#allocation3], 1
    %585 = vsyncpa %s584, 1
    %586 = vsyncpa [#allocation6], 1
    %587 = vsyncpa [#allocation4], 1
    %s588 = scalar_lea.sflag [#allocation4], 1
    %589 = vsyncpa %s588, 1

</llo_original>
